<compile_context>
chip_gen: v7x
topology: tpu7x:2x2x1
jax: 0.10.0
libtpu: 0.0.40
codegen_flags: <defaults>
</compile_context>

<pallas_src>
import functools

import jax
import jax.numpy as jnp
from jax.experimental import pallas as pl
from jax.experimental.pallas import tpu as pltpu


def _dws_conv3d_kernel(x_ref, dww_ref, dwb_ref, pww_ref, pwb_ref, o_ref, *,
                       cin, ksize, in_spatial, has_bias):
    """One batch element per grid step (batch dim squeezed out of the refs).

    x_ref  : (Cin,  S_pad)        VMEM, zero-padded flattened spatial axis
    dww_ref: (Cin,  kD*kH*kW)     VMEM  depthwise taps
    dwb_ref: (Cin,  1)            VMEM  depthwise bias column
    pww_ref: (Cout, Cin)          VMEM  pointwise weights
    pwb_ref: (Cout, 1)            VMEM  pointwise bias column
    o_ref  : (Cout, S)            VMEM  dense (stride-1) result at every anchor;
                                        invalid anchors are sliced off in the wrapper.
    """
    kd, kh, kw = ksize
    d, h, w = in_spatial
    hw = h * w
    s_out = o_ref.shape[-1]

    x = x_ref[...].astype(jnp.float32)            # (Cin, S_pad) — single dense load
    dww = dww_ref[...]                            # (Cin, NTAPS) — read once

    # ---- depthwise conv (groups == Cin), tap-major over the whole (Cin, S) slab ----
    # Static window slice per tap (lane-shift on the XLU); (Cin, 1) weight column is
    # lane-broadcast against the shifted slab on the VPU.
    acc = None
    tap = 0
    for i in range(kd):
        for j in range(kh):
            for l in range(kw):
                off = i * hw + j * w + l          # flat offset of tap (i, j, l)
                win = x[:, off:off + s_out]       # (Cin, S) shifted window
                term = win * dww[:, tap:tap + 1]  # (Cin, 1) broadcast along lanes
                acc = term if acc is None else acc + term
                tap += 1
    if has_bias:
        acc = acc + dwb_ref[...]                  # (Cin, 1) broadcast

    # ---- pointwise 1x1x1 conv: rank-1 updates onto the (Cout, S) slab --------------
    pww = pww_ref[...]                            # (Cout, Cin)
    out = None
    for c in range(cin):
        term = pww[:, c:c + 1] * acc[c:c + 1, :]  # (Cout,1)*(1,S) -> (Cout,S)
        out = term if out is None else out + term
    if has_bias:
        out = out + pwb_ref[...]                  # (Cout, 1) broadcast

    # Fully dense, unmasked store: Cout sublanes x S(multiple of 128) lanes.
    o_ref[...] = out.astype(o_ref.dtype)


def depthwise_separable_conv3d(x, dw_w, dw_b, pw_w, pw_b, *, stride=1, has_bias=True):
    """x: (N, Cin, D, H, W) f32
    dw_w: (Cin, 1, kD, kH, kW)   dw_b: (Cin,) or None
    pw_w: (Cout, Cin, 1, 1, 1)   pw_b: (Cout,) or None
    returns (N, Cout, Do, Ho, Wo) with Do = (D - kD)//stride + 1, etc. (VALID conv).
    """
    n, cin, d, h, w = x.shape
    cout = pw_w.shape[0]
    kd, kh, kw = dw_w.shape[2:]
    do = (d - kd) // stride + 1
    ho = (h - kh) // stride + 1
    wo = (w - kw) // stride + 1
    s_len = d * h * w
    ntaps = kd * kh * kw

    # Lane-dense layout: flatten (D, H, W) into one minor axis of length S and zero-pad
    # it so every per-tap window slice stays in bounds (pad to a multiple of 128).
    max_off = (kd - 1) * (h * w) + (kh - 1) * w + (kw - 1)
    s_pad = pl.cdiv(s_len + max_off, 128) * 128
    x_flat = x.reshape(n, cin, s_len)
    x_flat = jnp.pad(x_flat, ((0, 0), (0, 0), (0, s_pad - s_len)))

    dww = dw_w.reshape(cin, ntaps).astype(jnp.float32)
    pww = pw_w.reshape(cout, cin).astype(jnp.float32)
    dwb = (dw_b if dw_b is not None else jnp.zeros((cin,), jnp.float32))
    pwb = (pw_b if pw_b is not None else jnp.zeros((cout,), jnp.float32))
    dwb = dwb.reshape(cin, 1).astype(jnp.float32)
    pwb = pwb.reshape(cout, 1).astype(jnp.float32)

    kernel = functools.partial(
        _dws_conv3d_kernel,
        cin=cin, ksize=(kd, kh, kw), in_spatial=(d, h, w), has_bias=has_bias)

    # NOTE(v7x): at realistic D/H/W the (Cin, S_pad) block should be tiled over D with
    # a (kd-1)-plane halo in the index_map (and vmem_limit_bytes raised) so the
    # double-buffered blocks fit the 64 MiB VMEM; at these toy sizes (~12 KiB in /
    # 16 KiB out per grid step) the whole flattened volume fits trivially.
    z_flat = pl.pallas_call(
        kernel,
        out_shape=jax.ShapeDtypeStruct((n, cout, s_len), x.dtype),
        grid=(n,),
        in_specs=[
            pl.BlockSpec((pl.Squeezed(), cin, s_pad), lambda b: (b, 0, 0)),
            pl.BlockSpec((cin, ntaps), lambda b: (0, 0)),   # depthwise weights
            pl.BlockSpec((cin, 1), lambda b: (0, 0)),       # depthwise bias
            pl.BlockSpec((cout, cin), lambda b: (0, 0)),    # pointwise weights
            pl.BlockSpec((cout, 1), lambda b: (0, 0)),      # pointwise bias
        ],
        out_specs=pl.BlockSpec((pl.Squeezed(), cout, s_len), lambda b: (b, 0, 0)),
        compiler_params=pltpu.CompilerParams(
            # One batch element per grid step; "parallel" lets v7x's two TensorCores
            # split the batch (neutral on single-TC v5e/v6e).
            dimension_semantics=("parallel",)),
    )(x_flat, dww, dwb, pww, pwb)

    # Back to NCDHW, keep only valid anchors; stride applied as a static strided slice.
    z = z_flat.reshape(n, cout, d, h, w)
    z = z[:, :,
          : (do - 1) * stride + 1 : stride,
          : (ho - 1) * stride + 1 : stride,
          : (wo - 1) * stride + 1 : stride]
    return z


def _reference(x, dw_w, dw_b, pw_w, pw_b, stride):
    cin = x.shape[1]
    y = jax.lax.conv_general_dilated(
        x, dw_w, window_strides=(stride,) * 3, padding="VALID",
        dimension_numbers=("NCDHW", "OIDHW", "NCDHW"),
        feature_group_count=cin)
    y = y + dw_b.reshape(1, -1, 1, 1, 1)
    z = jax.lax.conv_general_dilated(
        y, pw_w, window_strides=(1, 1, 1), padding="VALID",
        dimension_numbers=("NCDHW", "OIDHW", "NCDHW"))
    z = z + pw_b.reshape(1, -1, 1, 1, 1)
    return z


if __name__ == "__main__":
    # Module config: in_channels=4, out_channels=8, kernel_size=3, stride=1, bias=True
    N, Cin, Cout = 2, 4, 8
    D = H = W = 8
    K = 3
    STRIDE = 1

    key = jax.random.PRNGKey(0)
    kx, k1, k2, k3, k4 = jax.random.split(key, 5)

    x = jax.random.normal(kx, (N, Cin, D, H, W), dtype=jnp.float32)
    # Same parameter shapes as torch.nn.Conv3d in the module's __init__:
    dw_w = jax.random.normal(k1, (Cin, 1, K, K, K), dtype=jnp.float32) * 0.1
    dw_b = jax.random.normal(k2, (Cin,), dtype=jnp.float32) * 0.1
    pw_w = jax.random.normal(k3, (Cout, Cin, 1, 1, 1), dtype=jnp.float32) * 0.1
    pw_b = jax.random.normal(k4, (Cout,), dtype=jnp.float32) * 0.1

    out = depthwise_separable_conv3d(x, dw_w, dw_b, pw_w, pw_b,
                                     stride=STRIDE, has_bias=True)
    out = jax.block_until_ready(out)

    ref = jax.block_until_ready(_reference(x, dw_w, dw_b, pw_w, pw_b, STRIDE))
    assert out.shape == ref.shape, (out.shape, ref.shape)
    assert jnp.allclose(out, ref, atol=1e-4, rtol=1e-4), float(
        jnp.max(jnp.abs(out - ref)))

    print("KERNEL_OK")
</pallas_src>

<mosaic_0001>
module attributes {stable_mosaic.version = 11 : i64} {
  func.func @_dws_conv3d_kernel(%arg0: i32, %arg1: memref<1x4x768xf32, #tpu.memory_space<vmem>>, %arg2: memref<4x27xf32, #tpu.memory_space<vmem>>, %arg3: memref<4x1xf32, #tpu.memory_space<vmem>>, %arg4: memref<8x4xf32, #tpu.memory_space<vmem>>, %arg5: memref<8x1xf32, #tpu.memory_space<vmem>>, %arg6: memref<1x8x512xf32, #tpu.memory_space<vmem>>) attributes {dimension_semantics = [#tpu.dimension_semantics<parallel>], iteration_bounds = array<i64: 2>, scalar_prefetch = 0 : i64, scratch_operands = 0 : i64, tpu.core_type = #tpu.core_type<tc>, window_params = [{transform_indices = @transform_0, window_bounds = array<i64: 1, 4, 768>}, {pipeline_mode = #tpu.pipeline_mode<synchronous>, transform_indices = @transform_1, window_bounds = array<i64: 4, 27>}, {pipeline_mode = #tpu.pipeline_mode<synchronous>, transform_indices = @transform_2, window_bounds = array<i64: 4, 1>}, {pipeline_mode = #tpu.pipeline_mode<synchronous>, transform_indices = @transform_3, window_bounds = array<i64: 8, 4>}, {pipeline_mode = #tpu.pipeline_mode<synchronous>, transform_indices = @transform_4, window_bounds = array<i64: 8, 1>}, {transform_indices = @transform_5, window_bounds = array<i64: 1, 8, 512>}]} {
    %c0 = arith.constant 0 : index
    %c0_0 = arith.constant 0 : index
    %c0_1 = arith.constant 0 : index
    %0 = vector.load %arg1[%c0, %c0_0, %c0_1] : memref<1x4x768xf32, #tpu.memory_space<vmem>>, vector<1x4x768xf32>
    %1 = vector.shape_cast %0 : vector<1x4x768xf32> to vector<4x768xf32>
    %c0_2 = arith.constant 0 : index
    %c0_3 = arith.constant 0 : index
    %2 = vector.load %arg2[%c0_2, %c0_3] : memref<4x27xf32, #tpu.memory_space<vmem>>, vector<4x27xf32>
    %3 = vector.extract_strided_slice %1 {offsets = [0, 0], sizes = [4, 512], strides = [1, 1]} : vector<4x768xf32> to vector<4x512xf32>
    %4 = vector.extract_strided_slice %2 {offsets = [0, 0], sizes = [4, 1], strides = [1, 1]} : vector<4x27xf32> to vector<4x1xf32>
    %5 = vector.broadcast %4 : vector<4x1xf32> to vector<4x512xf32>
    %6 = arith.mulf %3, %5 : vector<4x512xf32>
    %7 = vector.extract_strided_slice %1 {offsets = [0, 1], sizes = [4, 512], strides = [1, 1]} : vector<4x768xf32> to vector<4x512xf32>
    %8 = vector.extract_strided_slice %2 {offsets = [0, 1], sizes = [4, 1], strides = [1, 1]} : vector<4x27xf32> to vector<4x1xf32>
    %9 = vector.broadcast %8 : vector<4x1xf32> to vector<4x512xf32>
    %10 = arith.mulf %7, %9 : vector<4x512xf32>
    %11 = arith.addf %6, %10 : vector<4x512xf32>
    %12 = vector.extract_strided_slice %1 {offsets = [0, 2], sizes = [4, 512], strides = [1, 1]} : vector<4x768xf32> to vector<4x512xf32>
    %13 = vector.extract_strided_slice %2 {offsets = [0, 2], sizes = [4, 1], strides = [1, 1]} : vector<4x27xf32> to vector<4x1xf32>
    %14 = vector.broadcast %13 : vector<4x1xf32> to vector<4x512xf32>
    %15 = arith.mulf %12, %14 : vector<4x512xf32>
    %16 = arith.addf %11, %15 : vector<4x512xf32>
    %17 = vector.extract_strided_slice %1 {offsets = [0, 8], sizes = [4, 512], strides = [1, 1]} : vector<4x768xf32> to vector<4x512xf32>
    %18 = vector.extract_strided_slice %2 {offsets = [0, 3], sizes = [4, 1], strides = [1, 1]} : vector<4x27xf32> to vector<4x1xf32>
    %19 = vector.broadcast %18 : vector<4x1xf32> to vector<4x512xf32>
    %20 = arith.mulf %17, %19 : vector<4x512xf32>
    %21 = arith.addf %16, %20 : vector<4x512xf32>
    %22 = vector.extract_strided_slice %1 {offsets = [0, 9], sizes = [4, 512], strides = [1, 1]} : vector<4x768xf32> to vector<4x512xf32>
    %23 = vector.extract_strided_slice %2 {offsets = [0, 4], sizes = [4, 1], strides = [1, 1]} : vector<4x27xf32> to vector<4x1xf32>
    %24 = vector.broadcast %23 : vector<4x1xf32> to vector<4x512xf32>
    %25 = arith.mulf %22, %24 : vector<4x512xf32>
    %26 = arith.addf %21, %25 : vector<4x512xf32>
    %27 = vector.extract_strided_slice %1 {offsets = [0, 10], sizes = [4, 512], strides = [1, 1]} : vector<4x768xf32> to vector<4x512xf32>
    %28 = vector.extract_strided_slice %2 {offsets = [0, 5], sizes = [4, 1], strides = [1, 1]} : vector<4x27xf32> to vector<4x1xf32>
    %29 = vector.broadcast %28 : vector<4x1xf32> to vector<4x512xf32>
    %30 = arith.mulf %27, %29 : vector<4x512xf32>
    %31 = arith.addf %26, %30 : vector<4x512xf32>
    %32 = vector.extract_strided_slice %1 {offsets = [0, 16], sizes = [4, 512], strides = [1, 1]} : vector<4x768xf32> to vector<4x512xf32>
    %33 = vector.extract_strided_slice %2 {offsets = [0, 6], sizes = [4, 1], strides = [1, 1]} : vector<4x27xf32> to vector<4x1xf32>
    %34 = vector.broadcast %33 : vector<4x1xf32> to vector<4x512xf32>
    %35 = arith.mulf %32, %34 : vector<4x512xf32>
    %36 = arith.addf %31, %35 : vector<4x512xf32>
    %37 = vector.extract_strided_slice %1 {offsets = [0, 17], sizes = [4, 512], strides = [1, 1]} : vector<4x768xf32> to vector<4x512xf32>
    %38 = vector.extract_strided_slice %2 {offsets = [0, 7], sizes = [4, 1], strides = [1, 1]} : vector<4x27xf32> to vector<4x1xf32>
    %39 = vector.broadcast %38 : vector<4x1xf32> to vector<4x512xf32>
    %40 = arith.mulf %37, %39 : vector<4x512xf32>
    %41 = arith.addf %36, %40 : vector<4x512xf32>
    %42 = vector.extract_strided_slice %1 {offsets = [0, 18], sizes = [4, 512], strides = [1, 1]} : vector<4x768xf32> to vector<4x512xf32>
    %43 = vector.extract_strided_slice %2 {offsets = [0, 8], sizes = [4, 1], strides = [1, 1]} : vector<4x27xf32> to vector<4x1xf32>
    %44 = vector.broadcast %43 : vector<4x1xf32> to vector<4x512xf32>
    %45 = arith.mulf %42, %44 : vector<4x512xf32>
    %46 = arith.addf %41, %45 : vector<4x512xf32>
    %47 = vector.extract_strided_slice %1 {offsets = [0, 64], sizes = [4, 512], strides = [1, 1]} : vector<4x768xf32> to vector<4x512xf32>
    %48 = vector.extract_strided_slice %2 {offsets = [0, 9], sizes = [4, 1], strides = [1, 1]} : vector<4x27xf32> to vector<4x1xf32>
    %49 = vector.broadcast %48 : vector<4x1xf32> to vector<4x512xf32>
    %50 = arith.mulf %47, %49 : vector<4x512xf32>
    %51 = arith.addf %46, %50 : vector<4x512xf32>
    %52 = vector.extract_strided_slice %1 {offsets = [0, 65], sizes = [4, 512], strides = [1, 1]} : vector<4x768xf32> to vector<4x512xf32>
    %53 = vector.extract_strided_slice %2 {offsets = [0, 10], sizes = [4, 1], strides = [1, 1]} : vector<4x27xf32> to vector<4x1xf32>
    %54 = vector.broadcast %53 : vector<4x1xf32> to vector<4x512xf32>
    %55 = arith.mulf %52, %54 : vector<4x512xf32>
    %56 = arith.addf %51, %55 : vector<4x512xf32>
    %57 = vector.extract_strided_slice %1 {offsets = [0, 66], sizes = [4, 512], strides = [1, 1]} : vector<4x768xf32> to vector<4x512xf32>
    %58 = vector.extract_strided_slice %2 {offsets = [0, 11], sizes = [4, 1], strides = [1, 1]} : vector<4x27xf32> to vector<4x1xf32>
    %59 = vector.broadcast %58 : vector<4x1xf32> to vector<4x512xf32>
    %60 = arith.mulf %57, %59 : vector<4x512xf32>
    %61 = arith.addf %56, %60 : vector<4x512xf32>
    %62 = vector.extract_strided_slice %1 {offsets = [0, 72], sizes = [4, 512], strides = [1, 1]} : vector<4x768xf32> to vector<4x512xf32>
    %63 = vector.extract_strided_slice %2 {offsets = [0, 12], sizes = [4, 1], strides = [1, 1]} : vector<4x27xf32> to vector<4x1xf32>
    %64 = vector.broadcast %63 : vector<4x1xf32> to vector<4x512xf32>
    %65 = arith.mulf %62, %64 : vector<4x512xf32>
    %66 = arith.addf %61, %65 : vector<4x512xf32>
    %67 = vector.extract_strided_slice %1 {offsets = [0, 73], sizes = [4, 512], strides = [1, 1]} : vector<4x768xf32> to vector<4x512xf32>
    %68 = vector.extract_strided_slice %2 {offsets = [0, 13], sizes = [4, 1], strides = [1, 1]} : vector<4x27xf32> to vector<4x1xf32>
    %69 = vector.broadcast %68 : vector<4x1xf32> to vector<4x512xf32>
    %70 = arith.mulf %67, %69 : vector<4x512xf32>
    %71 = arith.addf %66, %70 : vector<4x512xf32>
    %72 = vector.extract_strided_slice %1 {offsets = [0, 74], sizes = [4, 512], strides = [1, 1]} : vector<4x768xf32> to vector<4x512xf32>
    %73 = vector.extract_strided_slice %2 {offsets = [0, 14], sizes = [4, 1], strides = [1, 1]} : vector<4x27xf32> to vector<4x1xf32>
    %74 = vector.broadcast %73 : vector<4x1xf32> to vector<4x512xf32>
    %75 = arith.mulf %72, %74 : vector<4x512xf32>
    %76 = arith.addf %71, %75 : vector<4x512xf32>
    %77 = vector.extract_strided_slice %1 {offsets = [0, 80], sizes = [4, 512], strides = [1, 1]} : vector<4x768xf32> to vector<4x512xf32>
    %78 = vector.extract_strided_slice %2 {offsets = [0, 15], sizes = [4, 1], strides = [1, 1]} : vector<4x27xf32> to vector<4x1xf32>
    %79 = vector.broadcast %78 : vector<4x1xf32> to vector<4x512xf32>
    %80 = arith.mulf %77, %79 : vector<4x512xf32>
    %81 = arith.addf %76, %80 : vector<4x512xf32>
    %82 = vector.extract_strided_slice %1 {offsets = [0, 81], sizes = [4, 512], strides = [1, 1]} : vector<4x768xf32> to vector<4x512xf32>
    %83 = vector.extract_strided_slice %2 {offsets = [0, 16], sizes = [4, 1], strides = [1, 1]} : vector<4x27xf32> to vector<4x1xf32>
    %84 = vector.broadcast %83 : vector<4x1xf32> to vector<4x512xf32>
    %85 = arith.mulf %82, %84 : vector<4x512xf32>
    %86 = arith.addf %81, %85 : vector<4x512xf32>
    %87 = vector.extract_strided_slice %1 {offsets = [0, 82], sizes = [4, 512], strides = [1, 1]} : vector<4x768xf32> to vector<4x512xf32>
    %88 = vector.extract_strided_slice %2 {offsets = [0, 17], sizes = [4, 1], strides = [1, 1]} : vector<4x27xf32> to vector<4x1xf32>
    %89 = vector.broadcast %88 : vector<4x1xf32> to vector<4x512xf32>
    %90 = arith.mulf %87, %89 : vector<4x512xf32>
    %91 = arith.addf %86, %90 : vector<4x512xf32>
    %92 = vector.extract_strided_slice %1 {offsets = [0, 128], sizes = [4, 512], strides = [1, 1]} : vector<4x768xf32> to vector<4x512xf32>
    %93 = vector.extract_strided_slice %2 {offsets = [0, 18], sizes = [4, 1], strides = [1, 1]} : vector<4x27xf32> to vector<4x1xf32>
    %94 = vector.broadcast %93 : vector<4x1xf32> to vector<4x512xf32>
    %95 = arith.mulf %92, %94 : vector<4x512xf32>
    %96 = arith.addf %91, %95 : vector<4x512xf32>
    %97 = vector.extract_strided_slice %1 {offsets = [0, 129], sizes = [4, 512], strides = [1, 1]} : vector<4x768xf32> to vector<4x512xf32>
    %98 = vector.extract_strided_slice %2 {offsets = [0, 19], sizes = [4, 1], strides = [1, 1]} : vector<4x27xf32> to vector<4x1xf32>
    %99 = vector.broadcast %98 : vector<4x1xf32> to vector<4x512xf32>
    %100 = arith.mulf %97, %99 : vector<4x512xf32>
    %101 = arith.addf %96, %100 : vector<4x512xf32>
    %102 = vector.extract_strided_slice %1 {offsets = [0, 130], sizes = [4, 512], strides = [1, 1]} : vector<4x768xf32> to vector<4x512xf32>
    %103 = vector.extract_strided_slice %2 {offsets = [0, 20], sizes = [4, 1], strides = [1, 1]} : vector<4x27xf32> to vector<4x1xf32>
    %104 = vector.broadcast %103 : vector<4x1xf32> to vector<4x512xf32>
    %105 = arith.mulf %102, %104 : vector<4x512xf32>
    %106 = arith.addf %101, %105 : vector<4x512xf32>
    %107 = vector.extract_strided_slice %1 {offsets = [0, 136], sizes = [4, 512], strides = [1, 1]} : vector<4x768xf32> to vector<4x512xf32>
    %108 = vector.extract_strided_slice %2 {offsets = [0, 21], sizes = [4, 1], strides = [1, 1]} : vector<4x27xf32> to vector<4x1xf32>
    %109 = vector.broadcast %108 : vector<4x1xf32> to vector<4x512xf32>
    %110 = arith.mulf %107, %109 : vector<4x512xf32>
    %111 = arith.addf %106, %110 : vector<4x512xf32>
    %112 = vector.extract_strided_slice %1 {offsets = [0, 137], sizes = [4, 512], strides = [1, 1]} : vector<4x768xf32> to vector<4x512xf32>
    %113 = vector.extract_strided_slice %2 {offsets = [0, 22], sizes = [4, 1], strides = [1, 1]} : vector<4x27xf32> to vector<4x1xf32>
    %114 = vector.broadcast %113 : vector<4x1xf32> to vector<4x512xf32>
    %115 = arith.mulf %112, %114 : vector<4x512xf32>
    %116 = arith.addf %111, %115 : vector<4x512xf32>
    %117 = vector.extract_strided_slice %1 {offsets = [0, 138], sizes = [4, 512], strides = [1, 1]} : vector<4x768xf32> to vector<4x512xf32>
    %118 = vector.extract_strided_slice %2 {offsets = [0, 23], sizes = [4, 1], strides = [1, 1]} : vector<4x27xf32> to vector<4x1xf32>
    %119 = vector.broadcast %118 : vector<4x1xf32> to vector<4x512xf32>
    %120 = arith.mulf %117, %119 : vector<4x512xf32>
    %121 = arith.addf %116, %120 : vector<4x512xf32>
    %122 = vector.extract_strided_slice %1 {offsets = [0, 144], sizes = [4, 512], strides = [1, 1]} : vector<4x768xf32> to vector<4x512xf32>
    %123 = vector.extract_strided_slice %2 {offsets = [0, 24], sizes = [4, 1], strides = [1, 1]} : vector<4x27xf32> to vector<4x1xf32>
    %124 = vector.broadcast %123 : vector<4x1xf32> to vector<4x512xf32>
    %125 = arith.mulf %122, %124 : vector<4x512xf32>
    %126 = arith.addf %121, %125 : vector<4x512xf32>
    %127 = vector.extract_strided_slice %1 {offsets = [0, 145], sizes = [4, 512], strides = [1, 1]} : vector<4x768xf32> to vector<4x512xf32>
    %128 = vector.extract_strided_slice %2 {offsets = [0, 25], sizes = [4, 1], strides = [1, 1]} : vector<4x27xf32> to vector<4x1xf32>
    %129 = vector.broadcast %128 : vector<4x1xf32> to vector<4x512xf32>
    %130 = arith.mulf %127, %129 : vector<4x512xf32>
    %131 = arith.addf %126, %130 : vector<4x512xf32>
    %132 = vector.extract_strided_slice %1 {offsets = [0, 146], sizes = [4, 512], strides = [1, 1]} : vector<4x768xf32> to vector<4x512xf32>
    %133 = vector.extract_strided_slice %2 {offsets = [0, 26], sizes = [4, 1], strides = [1, 1]} : vector<4x27xf32> to vector<4x1xf32>
    %134 = vector.broadcast %133 : vector<4x1xf32> to vector<4x512xf32>
    %135 = arith.mulf %132, %134 : vector<4x512xf32>
    %136 = arith.addf %131, %135 : vector<4x512xf32>
    %c0_4 = arith.constant 0 : index
    %c0_5 = arith.constant 0 : index
    %137 = vector.load %arg3[%c0_4, %c0_5] : memref<4x1xf32, #tpu.memory_space<vmem>>, vector<4x1xf32>
    %138 = vector.broadcast %137 : vector<4x1xf32> to vector<4x512xf32>
    %139 = arith.addf %136, %138 : vector<4x512xf32>
    %c0_6 = arith.constant 0 : index
    %c0_7 = arith.constant 0 : index
    %140 = vector.load %arg4[%c0_6, %c0_7] : memref<8x4xf32, #tpu.memory_space<vmem>>, vector<8x4xf32>
    %141 = vector.extract_strided_slice %140 {offsets = [0, 0], sizes = [8, 1], strides = [1, 1]} : vector<8x4xf32> to vector<8x1xf32>
    %142 = vector.extract_strided_slice %139 {offsets = [0, 0], sizes = [1, 512], strides = [1, 1]} : vector<4x512xf32> to vector<1x512xf32>
    %143 = vector.broadcast %141 : vector<8x1xf32> to vector<8x512xf32>
    %144 = vector.broadcast %142 : vector<1x512xf32> to vector<8x512xf32>
    %145 = arith.mulf %143, %144 : vector<8x512xf32>
    %146 = vector.extract_strided_slice %140 {offsets = [0, 1], sizes = [8, 1], strides = [1, 1]} : vector<8x4xf32> to vector<8x1xf32>
    %147 = vector.extract_strided_slice %139 {offsets = [1, 0], sizes = [1, 512], strides = [1, 1]} : vector<4x512xf32> to vector<1x512xf32>
    %148 = vector.broadcast %146 : vector<8x1xf32> to vector<8x512xf32>
    %149 = vector.broadcast %147 : vector<1x512xf32> to vector<8x512xf32>
    %150 = arith.mulf %148, %149 : vector<8x512xf32>
    %151 = arith.addf %145, %150 : vector<8x512xf32>
    %152 = vector.extract_strided_slice %140 {offsets = [0, 2], sizes = [8, 1], strides = [1, 1]} : vector<8x4xf32> to vector<8x1xf32>
    %153 = vector.extract_strided_slice %139 {offsets = [2, 0], sizes = [1, 512], strides = [1, 1]} : vector<4x512xf32> to vector<1x512xf32>
    %154 = vector.broadcast %152 : vector<8x1xf32> to vector<8x512xf32>
    %155 = vector.broadcast %153 : vector<1x512xf32> to vector<8x512xf32>
    %156 = arith.mulf %154, %155 : vector<8x512xf32>
    %157 = arith.addf %151, %156 : vector<8x512xf32>
    %158 = vector.extract_strided_slice %140 {offsets = [0, 3], sizes = [8, 1], strides = [1, 1]} : vector<8x4xf32> to vector<8x1xf32>
    %159 = vector.extract_strided_slice %139 {offsets = [3, 0], sizes = [1, 512], strides = [1, 1]} : vector<4x512xf32> to vector<1x512xf32>
    %160 = vector.broadcast %158 : vector<8x1xf32> to vector<8x512xf32>
    %161 = vector.broadcast %159 : vector<1x512xf32> to vector<8x512xf32>
    %162 = arith.mulf %160, %161 : vector<8x512xf32>
    %163 = arith.addf %157, %162 : vector<8x512xf32>
    %c0_8 = arith.constant 0 : index
    %c0_9 = arith.constant 0 : index
    %164 = vector.load %arg5[%c0_8, %c0_9] : memref<8x1xf32, #tpu.memory_space<vmem>>, vector<8x1xf32>
    %165 = vector.broadcast %164 : vector<8x1xf32> to vector<8x512xf32>
    %166 = arith.addf %163, %165 : vector<8x512xf32>
    %c0_10 = arith.constant 0 : index
    %c0_11 = arith.constant 0 : index
    %c0_12 = arith.constant 0 : index
    %167 = vector.load %arg6[%c0_10, %c0_11, %c0_12] : memref<1x8x512xf32, #tpu.memory_space<vmem>>, vector<1x8x512xf32>
    %168 = vector.shape_cast %167 : vector<1x8x512xf32> to vector<8x512xf32>
    %169 = vector.shape_cast %166 : vector<8x512xf32> to vector<1x8x512xf32>
    tpu.vector_store %arg6[%c0_10, %c0_11, %c0_12], %169 {strides = array<i32>} : memref<1x8x512xf32, #tpu.memory_space<vmem>>, vector<1x8x512xf32>,
    return
  }
  func.func @transform_0(%arg0: i32) -> (i32, i32, i32) {
    %c0_i32 = arith.constant 0 : i32
    %c0_i32_0 = arith.constant 0 : i32
    %c0_i32_1 = arith.constant 0 : i32
    return %arg0, %c0_i32, %c0_i32_0 : i32, i32, i32
  }
  func.func @transform_1(%arg0: i32) -> (i32, i32) {
    %c0_i32 = arith.constant 0 : i32
    %c0_i32_0 = arith.constant 0 : i32
    %c0_i32_1 = arith.constant 0 : i32
    return %c0_i32, %c0_i32_0 : i32, i32
  }
  func.func @transform_2(%arg0: i32) -> (i32, i32) {
    %c0_i32 = arith.constant 0 : i32
    %c0_i32_0 = arith.constant 0 : i32
    %c0_i32_1 = arith.constant 0 : i32
    return %c0_i32, %c0_i32_0 : i32, i32
  }
  func.func @transform_3(%arg0: i32) -> (i32, i32) {
    %c0_i32 = arith.constant 0 : i32
    %c0_i32_0 = arith.constant 0 : i32
    %c0_i32_1 = arith.constant 0 : i32
    return %c0_i32, %c0_i32_0 : i32, i32
  }
  func.func @transform_4(%arg0: i32) -> (i32, i32) {
    %c0_i32 = arith.constant 0 : i32
    %c0_i32_0 = arith.constant 0 : i32
    %c0_i32_1 = arith.constant 0 : i32
    return %c0_i32, %c0_i32_0 : i32, i32
  }
  func.func @transform_5(%arg0: i32) -> (i32, i32, i32) {
    %c0_i32 = arith.constant 0 : i32
    %c0_i32_0 = arith.constant 0 : i32
    %c0_i32_1 = arith.constant 0 : i32
    return %arg0, %c0_i32, %c0_i32_0 : i32, i32, i32
  }
}

</mosaic_0001>

<llo_original>
// kernel: tpu_custom_call.1
$region0: #{tpu_custom_call.1}
  #allocation0 [shape = 'u32[]', space=smem, size = 0x4, offset = 0x4, fixed_abs, tag = 'smem constant byte address 0x4 - core index']
  #allocation1 [shape = 'u32[144,128]{1,0:T(1,128)}', space=vmem, size = 0x12000, scoped, tag = 'internal scratch']
  %s0 = inlined_call_operand.hbm [shape: f32[2,4,768], index: 0, kind: input, shape index: {}]
  %s1 = inlined_call_operand.vmem [shape: f32[4,27], index: 1, kind: input, shape index: {}]
  %s2 = inlined_call_operand.vmem [shape: f32[4,1], index: 2, kind: input, shape index: {}]
  %s3 = inlined_call_operand.vmem [shape: f32[8,4], index: 3, kind: input, shape index: {}]
  %s4 = inlined_call_operand.vmem [shape: f32[8,1], index: 4, kind: input, shape index: {}]
  %s5 = inlined_call_operand.hbm [shape: f32[2,8,512], index: 5, kind: output, shape index: {}]
  %s6 = sld [smem:[#allocation0]]
  $region57: #{tpu_custom_call.1} parent=0
    _
  %s8 = ssub.s32 1, %s6
  %s9 = scalar_select 0, %s8, %s6
  $region1: #{tpu_custom_call.1} parent=0
    #allocation2 [shape = 'u8[24576]{0}', space=vmem, size = 0x6000, scoped, tag = 'input window, operand 0']
    #allocation3 [shape = 's32[2]{0}', space=sflag, size = 0x8, scoped, tag = 'scoped memory for tpu_custom_call.1']
    #allocation4 [shape = 's32[2]{0}', space=sflag, size = 0x8, scoped, tag = 'scoped memory for tpu_custom_call.1']
    #allocation5 [shape = 'u8[32768]{0}', space=vmem, size = 0x8000, scoped, tag = 'output window, operand 0']
    %10 = vsyncpa [#allocation3], 0
    %s11 = scalar_lea.sflag [#allocation3], 1
    %12 = vsyncpa %s11, 0
    %13 = vsyncpa [#allocation4], 0
    %s14 = scalar_lea.sflag [#allocation4], 1
    %15 = vsyncpa %s14, 0
    loop: start=0, step=1, limit=4
    $region2: #{tpu_custom_call.1} parent=1 // loop_pre_header
      _
    $region3: #{tpu_custom_call.1} parent=1 // loop_header
      %s17 = sphi 0, %s21
      %p18 = scmp.ge.s32.totalorder %s17, 4
      %s27 = sphi 0, %s29
      %s30 = sphi 0, %s27
      %s31 = sphi 0, %s30
      %s47 = sphi 0, %s31
      %s51 = sphi 0, %s51
      %s53 = sphi 0, %s51
      %s54 = sphi 0, %s53
      %s68 = sphi 0, %s54
      %s72 = sphi 0, %s72
      %s74 = sphi 0, %s72
      %s75 = sphi 0, %s74
      %s89 = sphi 0, %s75
      %s93 = sphi 0, %s93
      %s95 = sphi 0, %s93
      %s96 = sphi 0, %s95
      %s110 = sphi 0, %s96
      %s114 = sphi 0, %s114
      %s116 = sphi 0, %s114
      %s117 = sphi 0, %s116
      %s131 = sphi 0, %s117
      %s137 = sphi 0, %s139
      %s140 = sphi 0, %s137
      %s141 = sphi 0, %s140
      %s157 = sphi 0, %s141
    $region4: #{tpu_custom_call.1} parent=1 // loop_header_branch
      %20 = sbr.rel (%p18) target = $region8
    $region5: #{tpu_custom_call.1} parent=1 // loop_body
      %s22 = ssub.s32 %s17, 1
      %s23 = ssub.s32 %s17, 2
      %s24 = sadd.s32 %s17, 1
      %s25 = ssub.s32 %s17, %s24
      %p26 = scmp.eq.s32.totalorder %s25, 0
      %s28 = sadd.s32 %s27, 1
      %s29 = scalar_select %p26, %s27, %s28
      %p32 = pneg %p26
      %p33 = scmp.eq.s32.totalorder %s17, 1
      %p34 = por %p32, %p33
      %p35 = scmp.ne.s32.totalorder %s27, %s30
      %p36 = scmp.eq.s32.totalorder %s17, 0
      %p37 = por %p35, %p36
      %p38 = scmp.ne.s32.totalorder %s27, %s30
      %p39 = scmp.eq.s32.totalorder %s22, 1
      %p40 = por %p38, %p39
      %p41 = scmp.ne.s32.totalorder %s30, %s31
      %p42 = scmp.eq.s32.totalorder %s22, 0
      %p43 = por %p41, %p42
      %p44 = scmp.ne.s32.totalorder %s30, %s31
      %p45 = scmp.eq.s32.totalorder %s23, 1
      %p46 = por %p44, %p45
      %p48 = scmp.ne.s32.totalorder %s31, %s47
      %p49 = scmp.eq.s32.totalorder %s23, 0
      %p50 = por %p48, %p49
      %s52 = sadd.s32 %s51, 1
      %p55 = scmp.eq.s32.totalorder %s17, 1
      %p56 = scmp.ne.s32.totalorder %s51, %s53
      %p57 = scmp.eq.s32.totalorder %s17, 0
      %p58 = por %p56, %p57
      %p59 = scmp.ne.s32.totalorder %s51, %s53
      %p60 = scmp.eq.s32.totalorder %s22, 1
      %p61 = por %p59, %p60
      %p62 = scmp.ne.s32.totalorder %s53, %s54
      %p63 = scmp.eq.s32.totalorder %s22, 0
      %p64 = por %p62, %p63
      %p65 = scmp.ne.s32.totalorder %s53, %s54
      %p66 = scmp.eq.s32.totalorder %s23, 1
      %p67 = por %p65, %p66
      %p69 = scmp.ne.s32.totalorder %s54, %s68
      %p70 = scmp.eq.s32.totalorder %s23, 0
      %p71 = por %p69, %p70
      %s73 = sadd.s32 %s72, 1
      %p76 = scmp.eq.s32.totalorder %s17, 1
      %p77 = scmp.ne.s32.totalorder %s72, %s74
      %p78 = scmp.eq.s32.totalorder %s17, 0
      %p79 = por %p77, %p78
      %p80 = scmp.ne.s32.totalorder %s72, %s74
      %p81 = scmp.eq.s32.totalorder %s22, 1
      %p82 = por %p80, %p81
      %p83 = scmp.ne.s32.totalorder %s74, %s75
      %p84 = scmp.eq.s32.totalorder %s22, 0
      %p85 = por %p83, %p84
      %p86 = scmp.ne.s32.totalorder %s74, %s75
      %p87 = scmp.eq.s32.totalorder %s23, 1
      %p88 = por %p86, %p87
      %p90 = scmp.ne.s32.totalorder %s75, %s89
      %p91 = scmp.eq.s32.totalorder %s23, 0
      %p92 = por %p90, %p91
      %s94 = sadd.s32 %s93, 1
      %p97 = scmp.eq.s32.totalorder %s17, 1
      %p98 = scmp.ne.s32.totalorder %s93, %s95
      %p99 = scmp.eq.s32.totalorder %s17, 0
      %p100 = por %p98, %p99
      %p101 = scmp.ne.s32.totalorder %s93, %s95
      %p102 = scmp.eq.s32.totalorder %s22, 1
      %p103 = por %p101, %p102
      %p104 = scmp.ne.s32.totalorder %s95, %s96
      %p105 = scmp.eq.s32.totalorder %s22, 0
      %p106 = por %p104, %p105
      %p107 = scmp.ne.s32.totalorder %s95, %s96
      %p108 = scmp.eq.s32.totalorder %s23, 1
      %p109 = por %p107, %p108
      %p111 = scmp.ne.s32.totalorder %s96, %s110
      %p112 = scmp.eq.s32.totalorder %s23, 0
      %p113 = por %p111, %p112
      %s115 = sadd.s32 %s114, 1
      %p118 = scmp.eq.s32.totalorder %s17, 1
      %p119 = scmp.ne.s32.totalorder %s114, %s116
      %p120 = scmp.eq.s32.totalorder %s17, 0
      %p121 = por %p119, %p120
      %p122 = scmp.ne.s32.totalorder %s114, %s116
      %p123 = scmp.eq.s32.totalorder %s22, 1
      %p124 = por %p122, %p123
      %p125 = scmp.ne.s32.totalorder %s116, %s117
      %p126 = scmp.eq.s32.totalorder %s22, 0
      %p127 = por %p125, %p126
      %p128 = scmp.ne.s32.totalorder %s116, %s117
      %p129 = scmp.eq.s32.totalorder %s23, 1
      %p130 = por %p128, %p129
      %p132 = scmp.ne.s32.totalorder %s117, %s131
      %p133 = scmp.eq.s32.totalorder %s23, 0
      %p134 = por %p132, %p133
      %s135 = ssub.s32 %s17, %s24
      %p136 = scmp.eq.s32.totalorder %s135, 0
      %s138 = sadd.s32 %s137, 1
      %s139 = scalar_select %p136, %s137, %s138
      %p142 = pneg %p136
      %p143 = scmp.eq.s32.totalorder %s17, 1
      %p144 = por %p142, %p143
      %p145 = scmp.ne.s32.totalorder %s137, %s140
      %p146 = scmp.eq.s32.totalorder %s17, 0
      %p147 = por %p145, %p146
      %p148 = scmp.ne.s32.totalorder %s137, %s140
      %p149 = scmp.eq.s32.totalorder %s22, 1
      %p150 = por %p148, %p149
      %p151 = scmp.ne.s32.totalorder %s140, %s141
      %p152 = scmp.eq.s32.totalorder %s22, 0
      %p153 = por %p151, %p152
      %p154 = scmp.ne.s32.totalorder %s140, %s141
      %p155 = scmp.eq.s32.totalorder %s23, 1
      %p156 = por %p154, %p155
      %p158 = scmp.ne.s32.totalorder %s141, %s157
      %p159 = scmp.eq.s32.totalorder %s23, 0
      %p160 = por %p158, %p159
      %p161 = scmp.le.s32.totalorder 1, %s17
      %p162 = scmp.lt.s32.totalorder %s17, 3
      %p163 = pnand %p161, %p162
      %p164 = pneg %p163
      // Predicated region
      $region9: #{tpu_custom_call.1} parent=5 // pred_check
        _
      $region10: #{tpu_custom_call.1} parent=5 // pred_check_branch
        %166 = sbr.rel (%p163) target = $region12
      $region11: #{tpu_custom_call.1} parent=5 // pred_region
        %s167 = ssub.s32 %s17, 1
        // Predicated region
        $region13: #{tpu_custom_call.1} parent=11 // pred_check
          %p168 = pneg %p64
        $region14: #{tpu_custom_call.1} parent=11 // pred_check_branch
          %170 = sbr.rel (%p168) target = $region16
        $region15: #{tpu_custom_call.1} parent=11 // pred_region
          _
        $region16: #{tpu_custom_call.1} parent=11 // pred_fallthru
          _
        // Predicated region
        $region17: #{tpu_custom_call.1} parent=11 // pred_check
          %p171 = pneg %p85
        $region18: #{tpu_custom_call.1} parent=11 // pred_check_branch
          %173 = sbr.rel (%p171) target = $region20
        $region19: #{tpu_custom_call.1} parent=11 // pred_region
          _
        $region20: #{tpu_custom_call.1} parent=11 // pred_fallthru
          _
        // Predicated region
        $region21: #{tpu_custom_call.1} parent=11 // pred_check
          %p174 = pneg %p106
        $region22: #{tpu_custom_call.1} parent=11 // pred_check_branch
          %176 = sbr.rel (%p174) target = $region24
        $region23: #{tpu_custom_call.1} parent=11 // pred_region
          _
        $region24: #{tpu_custom_call.1} parent=11 // pred_fallthru
          _
        // Predicated region
        $region25: #{tpu_custom_call.1} parent=11 // pred_check
          %p177 = pneg %p127
        $region26: #{tpu_custom_call.1} parent=11 // pred_check_branch
          %179 = sbr.rel (%p177) target = $region28
        $region27: #{tpu_custom_call.1} parent=11 // pred_region
          _
        $region28: #{tpu_custom_call.1} parent=11 // pred_fallthru
          _
      $region12: #{tpu_custom_call.1} parent=5 // pred_fallthru
        _
      %p180 = scmp.lt.s32.totalorder %s17, 2
      // Predicated region
      $region29: #{tpu_custom_call.1} parent=5 // pred_check
        %p181 = pneg %p180
      $region30: #{tpu_custom_call.1} parent=5 // pred_check_branch
        %183 = sbr.rel (%p181) target = $region32
      $region31: #{tpu_custom_call.1} parent=5 // pred_region
        // Predicated region
        $region33: #{tpu_custom_call.1} parent=31 // pred_check
          %p184 = pneg %p37
        $region34: #{tpu_custom_call.1} parent=31 // pred_check_branch
          %186 = sbr.rel (%p184) target = $region36
        $region35: #{tpu_custom_call.1} parent=31 // pred_region
          %s187 = sand.u32 %s27, 1
          %s188 = scalar_lea.sflag [#allocation3], %s187
          %s189 = sand.u32 %s27, 1
          %s190 = smul.addr %s189, 24
          %s191 = scalar_lea.vmem [#allocation2], %s190
          %s193 = ssub.s32 384, 384
          %194 = vsyncadd %s188, %s193
          %s195 = smul.addr %s17, 6
          %s196 = smul.addr %s195, 64
          %s197 = scalar_lea.hbm %s0, %s196
          %s199 = sshll.u32 %s191, 4
          %s200 = int_to_ptr.vmem [resolvable:$true] %s199
          %202 = dma.hbm_to_vmem [thread:$0]  %s197, 384, %s200, %s188
        $region36: #{tpu_custom_call.1} parent=31 // pred_fallthru
          _
      $region32: #{tpu_custom_call.1} parent=5 // pred_fallthru
        _
      %p203 = scmp.le.s32.totalorder 1, %s17
      %p204 = scmp.lt.s32.totalorder %s17, 3
      %p205 = pnand %p203, %p204
      %p206 = pneg %p205
      // Predicated region
      $region37: #{tpu_custom_call.1} parent=5 // pred_check
        _
      $region38: #{tpu_custom_call.1} parent=5 // pred_check_branch
        %208 = sbr.rel (%p205) target = $region40
      $region39: #{tpu_custom_call.1} parent=5 // pred_region
        %s209 = ssub.s32 %s17, 1
        %s210 = sand.u32 %s30, 1
        %s211 = scalar_lea.sflag [#allocation3], %s210
        %s212 = sand.u32 %s30, 1
        %s213 = smul.addr %s212, 24
        %s214 = scalar_lea.vmem [#allocation2], %s213
        // Predicated region
        $region41: #{tpu_custom_call.1} parent=39 // pred_check
          %p215 = pneg %p43
        $region42: #{tpu_custom_call.1} parent=39 // pred_check_branch
          %217 = sbr.rel (%p215) target = $region44
        $region43: #{tpu_custom_call.1} parent=39 // pred_region
          %218 = dma.done %s211, 384
        $region44: #{tpu_custom_call.1} parent=39 // pred_fallthru
          _
        %s219 = sand.u32 %s30, 1
        %s220 = scalar_lea.sflag [#allocation3], %s219
        %s221 = sand.u32 %s30, 1
        %s222 = smul.addr %s221, 24
        %s223 = scalar_lea.vmem [#allocation2], %s222
        %p224 = pneg %p43
        %p225 = pneg %p40
        %p226 = pneg %p64
        %p227 = pneg %p61
        %p228 = pneg %p85
        %p229 = pneg %p82
        %p230 = pneg %p106
        %p231 = pneg %p103
        %p232 = pneg %p127
        %p233 = pneg %p124
        %p234 = pneg %p153
        %p235 = pneg %p150
        %s236 = sand.u32 %s140, 1
        %s237 = scalar_lea.sflag [#allocation4], %s236
        %s238 = sand.u32 %s140, 1
        %s239 = smul.addr %s238, 32
        %s240 = scalar_lea.vmem [#allocation5], %s239
        %v241 = vld [vmem:[%s214] sm:$0xff]
        %v242 = vld [vmem:[%s214 + $0x8] sm:$0xff]
        %v243 = vld [vmem:[%s214 + $0x10] sm:$0xff]
        %v244 = vld [vmem:[%s1] sm:$0xf]
        %246 = vset.pattern.permute.xlu0 0
        %247 = vperm.xlu0 %246, %v244
        %v248 = vpop.permute.xlu0 %247
        %v250 = vunpack.c.l.s4 839922192
        %v251 = vunpack.c.0.s8 %v250
        %v252 = vlaneseq
        %v253 = vshrl.u32 %v252, 7
        %v254 = vsub.s32 %v251, %v253
        %v255 = vrot.slane %v248, %v254
        %v257 = vmul.f32 %v241, %v255
        %v258 = vmul.f32 %v242, %v255
        %259 = vset.pattern.permute.xlu0 1
        %260 = vperm.xlu0 %259, %v244
        %v261 = vpop.permute.xlu0 %260
        %v263 = vunpack.c.l.s4 839922192
        %v264 = vunpack.c.0.s8 %v263
        %v265 = vlaneseq
        %v266 = vshrl.u32 %v265, 7
        %v267 = vsub.s32 %v264, %v266
        %v268 = vrot.slane %v261, %v267
        %v270 = vmul.f32 %v241, %v268
        %v271 = vmul.f32 %v242, %v268
        %v272 = vmul.f32 %v243, %v268
        %276 = vrot.lane.b32.xlu0 %v270, 127
        %v277 = vpop.permute.xlu0 %276
        %278 = vrot.lane.b32.xlu0 %v271, 127
        %v279 = vpop.permute.xlu0 %278
        %280 = vrot.lane.b32.xlu0 %v272, 127
        %v281 = vpop.permute.xlu0 %280
        %v282 = vrot.slane %v277, 4
        %v283 = vrot.slane %v279, 4
        %v284 = vrot.slane %v281, 4
        %vm285 = vcmask 1043456
        %v286 = vsel %vm285, %v282, %v283
        %vm287 = vcmask 1039360
        %v288 = vsel %vm287, %v277, %v286
        %v289 = vsel %vm285, %v283, %v284
        %v290 = vsel %vm287, %v279, %v289
        %v293 = vadd.f32 %v257, %v288
        %v294 = vadd.f32 %v258, %v290
        %295 = vset.pattern.permute.xlu0 2
        %296 = vperm.xlu0 %295, %v244
        %v297 = vpop.permute.xlu0 %296
        %v299 = vunpack.c.l.s4 839922192
        %v300 = vunpack.c.0.s8 %v299
        %v301 = vlaneseq
        %v302 = vshrl.u32 %v301, 7
        %v303 = vsub.s32 %v300, %v302
        %v304 = vrot.slane %v297, %v303
        %v306 = vmul.f32 %v241, %v304
        %v307 = vmul.f32 %v242, %v304
        %v308 = vmul.f32 %v243, %v304
        %312 = vrot.lane.b32.xlu0 %v306, 126
        %v313 = vpop.permute.xlu0 %312
        %314 = vrot.lane.b32.xlu0 %v307, 126
        %v315 = vpop.permute.xlu0 %314
        %316 = vrot.lane.b32.xlu0 %v308, 126
        %v317 = vpop.permute.xlu0 %316
        %v318 = vrot.slane %v313, 4
        %v319 = vrot.slane %v315, 4
        %v320 = vrot.slane %v317, 4
        %v321 = vsel %vm285, %v318, %v319
        %vm322 = vcmask 1031168
        %v323 = vsel %vm322, %v313, %v321
        %v324 = vsel %vm285, %v319, %v320
        %v325 = vsel %vm322, %v315, %v324
        %v328 = vadd.f32 %v293, %v323
        %v329 = vadd.f32 %v294, %v325
        %330 = vset.pattern.permute.xlu0 3
        %331 = vperm.xlu0 %330, %v244
        %v332 = vpop.permute.xlu0 %331
        %v334 = vunpack.c.l.s4 839922192
        %v335 = vunpack.c.0.s8 %v334
        %v336 = vlaneseq
        %v337 = vshrl.u32 %v336, 7
        %v338 = vsub.s32 %v335, %v337
        %v339 = vrot.slane %v332, %v338
        %v341 = vmul.f32 %v241, %v339
        %v342 = vmul.f32 %v242, %v339
        %v343 = vmul.f32 %v243, %v339
        %347 = vrot.lane.b32.xlu0 %v341, 120
        %v348 = vpop.permute.xlu0 %347
        %349 = vrot.lane.b32.xlu0 %v342, 120
        %v350 = vpop.permute.xlu0 %349
        %351 = vrot.lane.b32.xlu0 %v343, 120
        %v352 = vpop.permute.xlu0 %351
        %v353 = vrot.slane %v348, 4
        %v354 = vrot.slane %v350, 4
        %v355 = vrot.slane %v352, 4
        %v356 = vsel %vm285, %v353, %v354
        %vm357 = vcmask 982016
        %v358 = vsel %vm357, %v348, %v356
        %v359 = vsel %vm285, %v354, %v355
        %v360 = vsel %vm357, %v350, %v359
        %v363 = vadd.f32 %v328, %v358
        %v364 = vadd.f32 %v329, %v360
        %365 = vset.pattern.permute.xlu0 4
        %366 = vperm.xlu0 %365, %v244
        %v367 = vpop.permute.xlu0 %366
        %v369 = vunpack.c.l.s4 839922192
        %v370 = vunpack.c.0.s8 %v369
        %v371 = vlaneseq
        %v372 = vshrl.u32 %v371, 7
        %v373 = vsub.s32 %v370, %v372
        %v374 = vrot.slane %v367, %v373
        %v376 = vmul.f32 %v241, %v374
        %v377 = vmul.f32 %v242, %v374
        %v378 = vmul.f32 %v243, %v374
        %382 = vrot.lane.b32.xlu0 %v376, 119
        %v383 = vpop.permute.xlu0 %382
        %384 = vrot.lane.b32.xlu0 %v377, 119
        %v385 = vpop.permute.xlu0 %384
        %386 = vrot.lane.b32.xlu0 %v378, 119
        %v387 = vpop.permute.xlu0 %386
        %v388 = vrot.slane %v383, 4
        %v389 = vrot.slane %v385, 4
        %v390 = vrot.slane %v387, 4
        %v391 = vsel %vm285, %v388, %v389
        %vm392 = vcmask 973824
        %v393 = vsel %vm392, %v383, %v391
        %v394 = vsel %vm285, %v389, %v390
        %v395 = vsel %vm392, %v385, %v394
        %v398 = vadd.f32 %v363, %v393
        %v399 = vadd.f32 %v364, %v395
        %400 = vset.pattern.permute.xlu0 5
        %401 = vperm.xlu0 %400, %v244
        %v402 = vpop.permute.xlu0 %401
        %v404 = vunpack.c.l.s4 839922192
        %v405 = vunpack.c.0.s8 %v404
        %v406 = vlaneseq
        %v407 = vshrl.u32 %v406, 7
        %v408 = vsub.s32 %v405, %v407
        %v409 = vrot.slane %v402, %v408
        %v411 = vmul.f32 %v241, %v409
        %v412 = vmul.f32 %v242, %v409
        %v413 = vmul.f32 %v243, %v409
        %417 = vrot.lane.b32.xlu0 %v411, 118
        %v418 = vpop.permute.xlu0 %417
        %419 = vrot.lane.b32.xlu0 %v412, 118
        %v420 = vpop.permute.xlu0 %419
        %421 = vrot.lane.b32.xlu0 %v413, 118
        %v422 = vpop.permute.xlu0 %421
        %v423 = vrot.slane %v418, 4
        %v424 = vrot.slane %v420, 4
        %v425 = vrot.slane %v422, 4
        %v426 = vsel %vm285, %v423, %v424
        %vm427 = vcmask 965632
        %v428 = vsel %vm427, %v418, %v426
        %v429 = vsel %vm285, %v424, %v425
        %v430 = vsel %vm427, %v420, %v429
        %v433 = vadd.f32 %v398, %v428
        %v434 = vadd.f32 %v399, %v430
        %435 = vset.pattern.permute.xlu0 6
        %436 = vperm.xlu0 %435, %v244
        %v437 = vpop.permute.xlu0 %436
        %v439 = vunpack.c.l.s4 839922192
        %v440 = vunpack.c.0.s8 %v439
        %v441 = vlaneseq
        %v442 = vshrl.u32 %v441, 7
        %v443 = vsub.s32 %v440, %v442
        %v444 = vrot.slane %v437, %v443
        %v446 = vmul.f32 %v241, %v444
        %v447 = vmul.f32 %v242, %v444
        %v448 = vmul.f32 %v243, %v444
        %452 = vrot.lane.b32.xlu0 %v446, 112
        %v453 = vpop.permute.xlu0 %452
        %454 = vrot.lane.b32.xlu0 %v447, 112
        %v455 = vpop.permute.xlu0 %454
        %456 = vrot.lane.b32.xlu0 %v448, 112
        %v457 = vpop.permute.xlu0 %456
        %v458 = vrot.slane %v453, 4
        %v459 = vrot.slane %v455, 4
        %v460 = vrot.slane %v457, 4
        %v461 = vsel %vm285, %v458, %v459
        %vm462 = vcmask 916480
        %v463 = vsel %vm462, %v453, %v461
        %v464 = vsel %vm285, %v459, %v460
        %v465 = vsel %vm462, %v455, %v464
        %v468 = vadd.f32 %v433, %v463
        %v469 = vadd.f32 %v434, %v465
        %470 = vset.pattern.permute.xlu0 7
        %471 = vperm.xlu0 %470, %v244
        %v472 = vpop.permute.xlu0 %471
        %v474 = vunpack.c.l.s4 839922192
        %v475 = vunpack.c.0.s8 %v474
        %v476 = vlaneseq
        %v477 = vshrl.u32 %v476, 7
        %v478 = vsub.s32 %v475, %v477
        %v479 = vrot.slane %v472, %v478
        %v481 = vmul.f32 %v241, %v479
        %v482 = vmul.f32 %v242, %v479
        %v483 = vmul.f32 %v243, %v479
        %487 = vrot.lane.b32.xlu0 %v481, 111
        %v488 = vpop.permute.xlu0 %487
        %489 = vrot.lane.b32.xlu0 %v482, 111
        %v490 = vpop.permute.xlu0 %489
        %491 = vrot.lane.b32.xlu0 %v483, 111
        %v492 = vpop.permute.xlu0 %491
        %v493 = vrot.slane %v488, 4
        %v494 = vrot.slane %v490, 4
        %v495 = vrot.slane %v492, 4
        %v496 = vsel %vm285, %v493, %v494
        %vm497 = vcmask 908288
        %v498 = vsel %vm497, %v488, %v496
        %v499 = vsel %vm285, %v494, %v495
        %v500 = vsel %vm497, %v490, %v499
        %v503 = vadd.f32 %v468, %v498
        %v504 = vadd.f32 %v469, %v500
        %505 = vset.pattern.permute.xlu0 8
        %506 = vperm.xlu0 %505, %v244
        %v507 = vpop.permute.xlu0 %506
        %v509 = vunpack.c.l.s4 839922192
        %v510 = vunpack.c.0.s8 %v509
        %v511 = vlaneseq
        %v512 = vshrl.u32 %v511, 7
        %v513 = vsub.s32 %v510, %v512
        %v514 = vrot.slane %v507, %v513
        %v516 = vmul.f32 %v241, %v514
        %v517 = vmul.f32 %v242, %v514
        %v518 = vmul.f32 %v243, %v514
        %522 = vrot.lane.b32.xlu0 %v516, 110
        %v523 = vpop.permute.xlu0 %522
        %524 = vrot.lane.b32.xlu0 %v517, 110
        %v525 = vpop.permute.xlu0 %524
        %526 = vrot.lane.b32.xlu0 %v518, 110
        %v527 = vpop.permute.xlu0 %526
        %v528 = vrot.slane %v523, 4
        %v529 = vrot.slane %v525, 4
        %v530 = vrot.slane %v527, 4
        %v531 = vsel %vm285, %v528, %v529
        %vm532 = vcmask 900096
        %v533 = vsel %vm532, %v523, %v531
        %v534 = vsel %vm285, %v529, %v530
        %v535 = vsel %vm532, %v525, %v534
        %v538 = vadd.f32 %v503, %v533
        %v539 = vadd.f32 %v504, %v535
        %540 = vset.pattern.permute.xlu0 9
        %541 = vperm.xlu0 %540, %v244
        %v542 = vpop.permute.xlu0 %541
        %v544 = vunpack.c.l.s4 839922192
        %v545 = vunpack.c.0.s8 %v544
        %v546 = vlaneseq
        %v547 = vshrl.u32 %v546, 7
        %v548 = vsub.s32 %v545, %v547
        %v549 = vrot.slane %v542, %v548
        %v551 = vmul.f32 %v241, %v549
        %v552 = vmul.f32 %v242, %v549
        %v553 = vmul.f32 %v243, %v549
        %557 = vrot.lane.b32.xlu0 %v551, 64
        %v558 = vpop.permute.xlu0 %557
        %559 = vrot.lane.b32.xlu0 %v552, 64
        %v560 = vpop.permute.xlu0 %559
        %561 = vrot.lane.b32.xlu0 %v553, 64
        %v562 = vpop.permute.xlu0 %561
        %v563 = vrot.slane %v558, 4
        %v564 = vrot.slane %v560, 4
        %v565 = vrot.slane %v562, 4
        %v566 = vsel %vm285, %v563, %v564
        %vm567 = vcmask 523264
        %v568 = vsel %vm567, %v558, %v566
        %v569 = vsel %vm285, %v564, %v565
        %v570 = vsel %vm567, %v560, %v569
        %v573 = vadd.f32 %v538, %v568
        %v574 = vadd.f32 %v539, %v570
        %575 = vset.pattern.permute.xlu0 10
        %576 = vperm.xlu0 %575, %v244
        %v577 = vpop.permute.xlu0 %576
        %v579 = vunpack.c.l.s4 839922192
        %v580 = vunpack.c.0.s8 %v579
        %v581 = vlaneseq
        %v582 = vshrl.u32 %v581, 7
        %v583 = vsub.s32 %v580, %v582
        %v584 = vrot.slane %v577, %v583
        %v586 = vmul.f32 %v241, %v584
        %v587 = vmul.f32 %v242, %v584
        %v588 = vmul.f32 %v243, %v584
        %592 = vrot.lane.b32.xlu0 %v586, 63
        %v593 = vpop.permute.xlu0 %592
        %594 = vrot.lane.b32.xlu0 %v587, 63
        %v595 = vpop.permute.xlu0 %594
        %596 = vrot.lane.b32.xlu0 %v588, 63
        %v597 = vpop.permute.xlu0 %596
        %v598 = vrot.slane %v593, 4
        %v599 = vrot.slane %v595, 4
        %v600 = vrot.slane %v597, 4
        %v601 = vsel %vm285, %v598, %v599
        %vm602 = vcmask 515072
        %v603 = vsel %vm602, %v593, %v601
        %v604 = vsel %vm285, %v599, %v600
        %v605 = vsel %vm602, %v595, %v604
        %v608 = vadd.f32 %v573, %v603
        %v609 = vadd.f32 %v574, %v605
        %610 = vset.pattern.permute.xlu0 11
        %611 = vperm.xlu0 %610, %v244
        %v612 = vpop.permute.xlu0 %611
        %v614 = vunpack.c.l.s4 839922192
        %v615 = vunpack.c.0.s8 %v614
        %v616 = vlaneseq
        %v617 = vshrl.u32 %v616, 7
        %v618 = vsub.s32 %v615, %v617
        %v619 = vrot.slane %v612, %v618
        %v621 = vmul.f32 %v241, %v619
        %v622 = vmul.f32 %v242, %v619
        %v623 = vmul.f32 %v243, %v619
        %627 = vrot.lane.b32.xlu0 %v621, 62
        %v628 = vpop.permute.xlu0 %627
        %629 = vrot.lane.b32.xlu0 %v622, 62
        %v630 = vpop.permute.xlu0 %629
        %631 = vrot.lane.b32.xlu0 %v623, 62
        %v632 = vpop.permute.xlu0 %631
        %v633 = vrot.slane %v628, 4
        %v634 = vrot.slane %v630, 4
        %v635 = vrot.slane %v632, 4
        %v636 = vsel %vm285, %v633, %v634
        %vm637 = vcmask 506880
        %v638 = vsel %vm637, %v628, %v636
        %v639 = vsel %vm285, %v634, %v635
        %v640 = vsel %vm637, %v630, %v639
        %v643 = vadd.f32 %v608, %v638
        %v644 = vadd.f32 %v609, %v640
        %645 = vset.pattern.permute.xlu0 12
        %646 = vperm.xlu0 %645, %v244
        %v647 = vpop.permute.xlu0 %646
        %v649 = vunpack.c.l.s4 839922192
        %v650 = vunpack.c.0.s8 %v649
        %v651 = vlaneseq
        %v652 = vshrl.u32 %v651, 7
        %v653 = vsub.s32 %v650, %v652
        %v654 = vrot.slane %v647, %v653
        %v656 = vmul.f32 %v241, %v654
        %v657 = vmul.f32 %v242, %v654
        %v658 = vmul.f32 %v243, %v654
        %662 = vrot.lane.b32.xlu0 %v656, 56
        %v663 = vpop.permute.xlu0 %662
        %664 = vrot.lane.b32.xlu0 %v657, 56
        %v665 = vpop.permute.xlu0 %664
        %666 = vrot.lane.b32.xlu0 %v658, 56
        %v667 = vpop.permute.xlu0 %666
        %v668 = vrot.slane %v663, 4
        %v669 = vrot.slane %v665, 4
        %v670 = vrot.slane %v667, 4
        %v671 = vsel %vm285, %v668, %v669
        %vm672 = vcmask 457728
        %v673 = vsel %vm672, %v663, %v671
        %v674 = vsel %vm285, %v669, %v670
        %v675 = vsel %vm672, %v665, %v674
        %v678 = vadd.f32 %v643, %v673
        %v679 = vadd.f32 %v644, %v675
        %680 = vset.pattern.permute.xlu0 13
        %681 = vperm.xlu0 %680, %v244
        %v682 = vpop.permute.xlu0 %681
        %v684 = vunpack.c.l.s4 839922192
        %v685 = vunpack.c.0.s8 %v684
        %v686 = vlaneseq
        %v687 = vshrl.u32 %v686, 7
        %v688 = vsub.s32 %v685, %v687
        %v689 = vrot.slane %v682, %v688
        %v691 = vmul.f32 %v241, %v689
        %v692 = vmul.f32 %v242, %v689
        %v693 = vmul.f32 %v243, %v689
        %697 = vrot.lane.b32.xlu0 %v691, 55
        %v698 = vpop.permute.xlu0 %697
        %699 = vrot.lane.b32.xlu0 %v692, 55
        %v700 = vpop.permute.xlu0 %699
        %701 = vrot.lane.b32.xlu0 %v693, 55
        %v702 = vpop.permute.xlu0 %701
        %v703 = vrot.slane %v698, 4
        %v704 = vrot.slane %v700, 4
        %v705 = vrot.slane %v702, 4
        %v706 = vsel %vm285, %v703, %v704
        %vm707 = vcmask 449536
        %v708 = vsel %vm707, %v698, %v706
        %v709 = vsel %vm285, %v704, %v705
        %v710 = vsel %vm707, %v700, %v709
        %v713 = vadd.f32 %v678, %v708
        %v714 = vadd.f32 %v679, %v710
        %715 = vset.pattern.permute.xlu0 14
        %716 = vperm.xlu0 %715, %v244
        %v717 = vpop.permute.xlu0 %716
        %v719 = vunpack.c.l.s4 839922192
        %v720 = vunpack.c.0.s8 %v719
        %v721 = vlaneseq
        %v722 = vshrl.u32 %v721, 7
        %v723 = vsub.s32 %v720, %v722
        %v724 = vrot.slane %v717, %v723
        %v726 = vmul.f32 %v241, %v724
        %v727 = vmul.f32 %v242, %v724
        %v728 = vmul.f32 %v243, %v724
        %732 = vrot.lane.b32.xlu0 %v726, 54
        %v733 = vpop.permute.xlu0 %732
        %734 = vrot.lane.b32.xlu0 %v727, 54
        %v735 = vpop.permute.xlu0 %734
        %736 = vrot.lane.b32.xlu0 %v728, 54
        %v737 = vpop.permute.xlu0 %736
        %v738 = vrot.slane %v733, 4
        %v739 = vrot.slane %v735, 4
        %v740 = vrot.slane %v737, 4
        %v741 = vsel %vm285, %v738, %v739
        %vm742 = vcmask 441344
        %v743 = vsel %vm742, %v733, %v741
        %v744 = vsel %vm285, %v739, %v740
        %v745 = vsel %vm742, %v735, %v744
        %v748 = vadd.f32 %v713, %v743
        %v749 = vadd.f32 %v714, %v745
        %750 = vset.pattern.permute.xlu0 15
        %751 = vperm.xlu0 %750, %v244
        %v752 = vpop.permute.xlu0 %751
        %v754 = vunpack.c.l.s4 839922192
        %v755 = vunpack.c.0.s8 %v754
        %v756 = vlaneseq
        %v757 = vshrl.u32 %v756, 7
        %v758 = vsub.s32 %v755, %v757
        %v759 = vrot.slane %v752, %v758
        %v761 = vmul.f32 %v241, %v759
        %v762 = vmul.f32 %v242, %v759
        %v763 = vmul.f32 %v243, %v759
        %767 = vrot.lane.b32.xlu0 %v761, 48
        %v768 = vpop.permute.xlu0 %767
        %769 = vrot.lane.b32.xlu0 %v762, 48
        %v770 = vpop.permute.xlu0 %769
        %771 = vrot.lane.b32.xlu0 %v763, 48
        %v772 = vpop.permute.xlu0 %771
        %v773 = vrot.slane %v768, 4
        %v774 = vrot.slane %v770, 4
        %v775 = vrot.slane %v772, 4
        %v776 = vsel %vm285, %v773, %v774
        %vm777 = vcmask 392192
        %v778 = vsel %vm777, %v768, %v776
        %v779 = vsel %vm285, %v774, %v775
        %v780 = vsel %vm777, %v770, %v779
        %v783 = vadd.f32 %v748, %v778
        %v784 = vadd.f32 %v749, %v780
        %785 = vset.pattern.permute.xlu0 16
        %786 = vperm.xlu0 %785, %v244
        %v787 = vpop.permute.xlu0 %786
        %v789 = vunpack.c.l.s4 839922192
        %v790 = vunpack.c.0.s8 %v789
        %v791 = vlaneseq
        %v792 = vshrl.u32 %v791, 7
        %v793 = vsub.s32 %v790, %v792
        %v794 = vrot.slane %v787, %v793
        %v796 = vmul.f32 %v241, %v794
        %v797 = vmul.f32 %v242, %v794
        %v798 = vmul.f32 %v243, %v794
        %802 = vrot.lane.b32.xlu0 %v796, 47
        %v803 = vpop.permute.xlu0 %802
        %804 = vrot.lane.b32.xlu0 %v797, 47
        %v805 = vpop.permute.xlu0 %804
        %806 = vrot.lane.b32.xlu0 %v798, 47
        %v807 = vpop.permute.xlu0 %806
        %v808 = vrot.slane %v803, 4
        %v809 = vrot.slane %v805, 4
        %v810 = vrot.slane %v807, 4
        %v811 = vsel %vm285, %v808, %v809
        %vm812 = vcmask 384000
        %v813 = vsel %vm812, %v803, %v811
        %v814 = vsel %vm285, %v809, %v810
        %v815 = vsel %vm812, %v805, %v814
        %v818 = vadd.f32 %v783, %v813
        %v819 = vadd.f32 %v784, %v815
        %820 = vset.pattern.permute.xlu0 17
        %821 = vperm.xlu0 %820, %v244
        %v822 = vpop.permute.xlu0 %821
        %v824 = vunpack.c.l.s4 839922192
        %v825 = vunpack.c.0.s8 %v824
        %v826 = vlaneseq
        %v827 = vshrl.u32 %v826, 7
        %v828 = vsub.s32 %v825, %v827
        %v829 = vrot.slane %v822, %v828
        %v831 = vmul.f32 %v241, %v829
        %v832 = vmul.f32 %v242, %v829
        %v833 = vmul.f32 %v243, %v829
        %837 = vrot.lane.b32.xlu0 %v831, 46
        %v838 = vpop.permute.xlu0 %837
        %839 = vrot.lane.b32.xlu0 %v832, 46
        %v840 = vpop.permute.xlu0 %839
        %841 = vrot.lane.b32.xlu0 %v833, 46
        %v842 = vpop.permute.xlu0 %841
        %v843 = vrot.slane %v838, 4
        %v844 = vrot.slane %v840, 4
        %v845 = vrot.slane %v842, 4
        %v846 = vsel %vm285, %v843, %v844
        %vm847 = vcmask 375808
        %v848 = vsel %vm847, %v838, %v846
        %v849 = vsel %vm285, %v844, %v845
        %v850 = vsel %vm847, %v840, %v849
        %v853 = vadd.f32 %v818, %v848
        %v854 = vadd.f32 %v819, %v850
        %855 = vset.pattern.permute.xlu0 18
        %856 = vperm.xlu0 %855, %v244
        %v857 = vpop.permute.xlu0 %856
        %v861 = vrot.slane %v241, 4
        %v862 = vrot.slane %v242, 4
        %v863 = vrot.slane %v243, 4
        %v864 = vsel %vm285, %v861, %v862
        %v865 = vsel %vm285, %v862, %v863
        %v869 = vunpack.c.l.s4 839922192
        %v870 = vunpack.c.0.s8 %v869
        %v871 = vlaneseq
        %v872 = vshrl.u32 %v871, 7
        %v873 = vsub.s32 %v870, %v872
        %v874 = vrot.slane %v857, %v873
        %v876 = vmul.f32 %v864, %v874
        %v877 = vmul.f32 %v865, %v874
        %v878 = vadd.f32 %v853, %v876
        %v879 = vadd.f32 %v854, %v877
        %880 = vset.pattern.permute.xlu0 19
        %881 = vperm.xlu0 %880, %v244
        %v882 = vpop.permute.xlu0 %881
        %883 = vrot.lane.b32.xlu0 %v241, 127
        %v884 = vpop.permute.xlu0 %883
        %885 = vrot.lane.b32.xlu0 %v242, 127
        %v886 = vpop.permute.xlu0 %885
        %887 = vrot.lane.b32.xlu0 %v243, 127
        %v888 = vpop.permute.xlu0 %887
        %v889 = vrot.slane %v884, 4
        %v890 = vrot.slane %v886, 4
        %v891 = vrot.slane %v888, 4
        %v892 = vsel %vm285, %v889, %v890
        %v893 = vsel %vm287, %v892, %v886
        %v894 = vsel %vm285, %v890, %v891
        %v895 = vsel %vm287, %v894, %v888
        %v899 = vunpack.c.l.s4 839922192
        %v900 = vunpack.c.0.s8 %v899
        %v901 = vlaneseq
        %v902 = vshrl.u32 %v901, 7
        %v903 = vsub.s32 %v900, %v902
        %v904 = vrot.slane %v882, %v903
        %v906 = vmul.f32 %v893, %v904
        %v907 = vmul.f32 %v895, %v904
        %v908 = vadd.f32 %v878, %v906
        %v909 = vadd.f32 %v879, %v907
        %910 = vset.pattern.permute.xlu0 20
        %911 = vperm.xlu0 %910, %v244
        %v912 = vpop.permute.xlu0 %911
        %913 = vrot.lane.b32.xlu0 %v241, 126
        %v914 = vpop.permute.xlu0 %913
        %915 = vrot.lane.b32.xlu0 %v242, 126
        %v916 = vpop.permute.xlu0 %915
        %917 = vrot.lane.b32.xlu0 %v243, 126
        %v918 = vpop.permute.xlu0 %917
        %v919 = vrot.slane %v914, 4
        %v920 = vrot.slane %v916, 4
        %v921 = vrot.slane %v918, 4
        %v922 = vsel %vm285, %v919, %v920
        %v923 = vsel %vm322, %v922, %v916
        %v924 = vsel %vm285, %v920, %v921
        %v925 = vsel %vm322, %v924, %v918
        %v929 = vunpack.c.l.s4 839922192
        %v930 = vunpack.c.0.s8 %v929
        %v931 = vlaneseq
        %v932 = vshrl.u32 %v931, 7
        %v933 = vsub.s32 %v930, %v932
        %v934 = vrot.slane %v912, %v933
        %v936 = vmul.f32 %v923, %v934
        %v937 = vmul.f32 %v925, %v934
        %v938 = vadd.f32 %v908, %v936
        %v939 = vadd.f32 %v909, %v937
        %940 = vset.pattern.permute.xlu0 21
        %941 = vperm.xlu0 %940, %v244
        %v942 = vpop.permute.xlu0 %941
        %943 = vrot.lane.b32.xlu0 %v241, 120
        %v944 = vpop.permute.xlu0 %943
        %945 = vrot.lane.b32.xlu0 %v242, 120
        %v946 = vpop.permute.xlu0 %945
        %947 = vrot.lane.b32.xlu0 %v243, 120
        %v948 = vpop.permute.xlu0 %947
        %v949 = vrot.slane %v944, 4
        %v950 = vrot.slane %v946, 4
        %v951 = vrot.slane %v948, 4
        %v952 = vsel %vm285, %v949, %v950
        %v953 = vsel %vm357, %v952, %v946
        %v954 = vsel %vm285, %v950, %v951
        %v955 = vsel %vm357, %v954, %v948
        %v959 = vunpack.c.l.s4 839922192
        %v960 = vunpack.c.0.s8 %v959
        %v961 = vlaneseq
        %v962 = vshrl.u32 %v961, 7
        %v963 = vsub.s32 %v960, %v962
        %v964 = vrot.slane %v942, %v963
        %v966 = vmul.f32 %v953, %v964
        %v967 = vmul.f32 %v955, %v964
        %v968 = vadd.f32 %v938, %v966
        %v969 = vadd.f32 %v939, %v967
        %970 = vset.pattern.permute.xlu0 22
        %971 = vperm.xlu0 %970, %v244
        %v972 = vpop.permute.xlu0 %971
        %973 = vrot.lane.b32.xlu0 %v241, 119
        %v974 = vpop.permute.xlu0 %973
        %975 = vrot.lane.b32.xlu0 %v242, 119
        %v976 = vpop.permute.xlu0 %975
        %977 = vrot.lane.b32.xlu0 %v243, 119
        %v978 = vpop.permute.xlu0 %977
        %v979 = vrot.slane %v974, 4
        %v980 = vrot.slane %v976, 4
        %v981 = vrot.slane %v978, 4
        %v982 = vsel %vm285, %v979, %v980
        %v983 = vsel %vm392, %v982, %v976
        %v984 = vsel %vm285, %v980, %v981
        %v985 = vsel %vm392, %v984, %v978
        %v989 = vunpack.c.l.s4 839922192
        %v990 = vunpack.c.0.s8 %v989
        %v991 = vlaneseq
        %v992 = vshrl.u32 %v991, 7
        %v993 = vsub.s32 %v990, %v992
        %v994 = vrot.slane %v972, %v993
        %v996 = vmul.f32 %v983, %v994
        %v997 = vmul.f32 %v985, %v994
        %v998 = vadd.f32 %v968, %v996
        %v999 = vadd.f32 %v969, %v997
        %1000 = vset.pattern.permute.xlu0 23
        %1001 = vperm.xlu0 %1000, %v244
        %v1002 = vpop.permute.xlu0 %1001
        %1003 = vrot.lane.b32.xlu0 %v241, 118
        %v1004 = vpop.permute.xlu0 %1003
        %1005 = vrot.lane.b32.xlu0 %v242, 118
        %v1006 = vpop.permute.xlu0 %1005
        %1007 = vrot.lane.b32.xlu0 %v243, 118
        %v1008 = vpop.permute.xlu0 %1007
        %v1009 = vrot.slane %v1004, 4
        %v1010 = vrot.slane %v1006, 4
        %v1011 = vrot.slane %v1008, 4
        %v1012 = vsel %vm285, %v1009, %v1010
        %v1013 = vsel %vm427, %v1012, %v1006
        %v1014 = vsel %vm285, %v1010, %v1011
        %v1015 = vsel %vm427, %v1014, %v1008
        %v1019 = vunpack.c.l.s4 839922192
        %v1020 = vunpack.c.0.s8 %v1019
        %v1021 = vlaneseq
        %v1022 = vshrl.u32 %v1021, 7
        %v1023 = vsub.s32 %v1020, %v1022
        %v1024 = vrot.slane %v1002, %v1023
        %v1026 = vmul.f32 %v1013, %v1024
        %v1027 = vmul.f32 %v1015, %v1024
        %v1028 = vadd.f32 %v998, %v1026
        %v1029 = vadd.f32 %v999, %v1027
        %1030 = vset.pattern.permute.xlu0 24
        %1031 = vperm.xlu0 %1030, %v244
        %v1032 = vpop.permute.xlu0 %1031
        %1033 = vrot.lane.b32.xlu0 %v241, 112
        %v1034 = vpop.permute.xlu0 %1033
        %1035 = vrot.lane.b32.xlu0 %v242, 112
        %v1036 = vpop.permute.xlu0 %1035
        %1037 = vrot.lane.b32.xlu0 %v243, 112
        %v1038 = vpop.permute.xlu0 %1037
        %v1039 = vrot.slane %v1034, 4
        %v1040 = vrot.slane %v1036, 4
        %v1041 = vrot.slane %v1038, 4
        %v1042 = vsel %vm285, %v1039, %v1040
        %v1043 = vsel %vm462, %v1042, %v1036
        %v1044 = vsel %vm285, %v1040, %v1041
        %v1045 = vsel %vm462, %v1044, %v1038
        %v1049 = vunpack.c.l.s4 839922192
        %v1050 = vunpack.c.0.s8 %v1049
        %v1051 = vlaneseq
        %v1052 = vshrl.u32 %v1051, 7
        %v1053 = vsub.s32 %v1050, %v1052
        %v1054 = vrot.slane %v1032, %v1053
        %v1056 = vmul.f32 %v1043, %v1054
        %v1057 = vmul.f32 %v1045, %v1054
        %v1058 = vadd.f32 %v1028, %v1056
        %v1059 = vadd.f32 %v1029, %v1057
        %1060 = vset.pattern.permute.xlu0 25
        %1061 = vperm.xlu0 %1060, %v244
        %v1062 = vpop.permute.xlu0 %1061
        %1063 = vrot.lane.b32.xlu0 %v241, 111
        %v1064 = vpop.permute.xlu0 %1063
        %1065 = vrot.lane.b32.xlu0 %v242, 111
        %v1066 = vpop.permute.xlu0 %1065
        %1067 = vrot.lane.b32.xlu0 %v243, 111
        %v1068 = vpop.permute.xlu0 %1067
        %v1069 = vrot.slane %v1064, 4
        %v1070 = vrot.slane %v1066, 4
        %v1071 = vrot.slane %v1068, 4
        %v1072 = vsel %vm285, %v1069, %v1070
        %v1073 = vsel %vm497, %v1072, %v1066
        %v1074 = vsel %vm285, %v1070, %v1071
        %v1075 = vsel %vm497, %v1074, %v1068
        %v1079 = vunpack.c.l.s4 839922192
        %v1080 = vunpack.c.0.s8 %v1079
        %v1081 = vlaneseq
        %v1082 = vshrl.u32 %v1081, 7
        %v1083 = vsub.s32 %v1080, %v1082
        %v1084 = vrot.slane %v1062, %v1083
        %v1086 = vmul.f32 %v1073, %v1084
        %v1087 = vmul.f32 %v1075, %v1084
        %v1088 = vadd.f32 %v1058, %v1086
        %v1089 = vadd.f32 %v1059, %v1087
        %1090 = vset.pattern.permute.xlu0 26
        %1091 = vperm.xlu0 %1090, %v244
        %v1092 = vpop.permute.xlu0 %1091
        %1093 = vrot.lane.b32.xlu0 %v241, 110
        %v1094 = vpop.permute.xlu0 %1093
        %1095 = vrot.lane.b32.xlu0 %v242, 110
        %v1096 = vpop.permute.xlu0 %1095
        %1097 = vrot.lane.b32.xlu0 %v243, 110
        %v1098 = vpop.permute.xlu0 %1097
        %v1099 = vrot.slane %v1094, 4
        %v1100 = vrot.slane %v1096, 4
        %v1101 = vrot.slane %v1098, 4
        %v1102 = vsel %vm285, %v1099, %v1100
        %v1103 = vsel %vm532, %v1102, %v1096
        %v1104 = vsel %vm285, %v1100, %v1101
        %v1105 = vsel %vm532, %v1104, %v1098
        %v1109 = vunpack.c.l.s4 839922192
        %v1110 = vunpack.c.0.s8 %v1109
        %v1111 = vlaneseq
        %v1112 = vshrl.u32 %v1111, 7
        %v1113 = vsub.s32 %v1110, %v1112
        %v1114 = vrot.slane %v1092, %v1113
        %v1116 = vmul.f32 %v1103, %v1114
        %v1117 = vmul.f32 %v1105, %v1114
        %v1118 = vadd.f32 %v1088, %v1116
        %v1119 = vadd.f32 %v1089, %v1117
        %v1120 = vld [vmem:[%s2] sm:$0xf]
        %1122 = vset.pattern.permute.xlu0 0
        %1123 = vperm.xlu0 %1122, %v1120
        %v1124 = vpop.permute.xlu0 %1123
        %v1126 = vunpack.c.l.s4 839922192
        %v1127 = vunpack.c.0.s8 %v1126
        %v1128 = vlaneseq
        %v1129 = vshrl.u32 %v1128, 7
        %v1130 = vsub.s32 %v1127, %v1129
        %v1131 = vrot.slane %v1124, %v1130
        %v1133 = vadd.f32 %v1118, %v1131
        %v1134 = vadd.f32 %v1119, %v1131
        %v1135 = vld [vmem:[%s3] sm:$0xff]
        %1137 = vset.pattern.permute.xlu0 0
        %1138 = vperm.xlu0 %1137, %v1135
        %v1139 = vpop.permute.xlu0 %1138
        %v1143 = vlaneseq
        %v1144 = vshrl.u32 %v1143, 7
        %v1145 = vsub.s32 0, %v1144
        %v1146 = vrot.slane %v1133, %v1145
        %v1147 = vlaneseq
        %v1148 = vshrl.u32 %v1147, 7
        %v1149 = vsub.s32 4, %v1148
        %v1150 = vrot.slane %v1133, %v1149
        %v1151 = vlaneseq
        %v1152 = vshrl.u32 %v1151, 7
        %v1153 = vsub.s32 0, %v1152
        %v1154 = vrot.slane %v1134, %v1153
        %v1155 = vlaneseq
        %v1156 = vshrl.u32 %v1155, 7
        %v1157 = vsub.s32 4, %v1156
        %v1158 = vrot.slane %v1134, %v1157
        %v1163 = vlaneseq
        %v1164 = vshrl.u32 %v1163, 7
        %v1165 = vsub.s32 0, %v1164
        %v1166 = vrot.slane %v1146, %v1165
        %v1167 = vlaneseq
        %v1168 = vshrl.u32 %v1167, 7
        %v1169 = vsub.s32 0, %v1168
        %v1170 = vrot.slane %v1150, %v1169
        %v1171 = vlaneseq
        %v1172 = vshrl.u32 %v1171, 7
        %v1173 = vsub.s32 0, %v1172
        %v1174 = vrot.slane %v1154, %v1173
        %v1175 = vlaneseq
        %v1176 = vshrl.u32 %v1175, 7
        %v1177 = vsub.s32 0, %v1176
        %v1178 = vrot.slane %v1158, %v1177
        %v1179 = vmul.f32 %v1139, %v1166
        %v1180 = vmul.f32 %v1139, %v1170
        %v1181 = vmul.f32 %v1139, %v1174
        %v1182 = vmul.f32 %v1139, %v1178
        %1183 = vset.pattern.permute.xlu0 1
        %1184 = vperm.xlu0 %1183, %v1135
        %v1185 = vpop.permute.xlu0 %1184
        %v1187 = vlaneseq
        %v1188 = vshrl.u32 %v1187, 7
        %v1189 = vsub.s32 1, %v1188
        %v1190 = vrot.slane %v1133, %v1189
        %v1191 = vlaneseq
        %v1192 = vshrl.u32 %v1191, 7
        %v1193 = vsub.s32 5, %v1192
        %v1194 = vrot.slane %v1133, %v1193
        %v1195 = vlaneseq
        %v1196 = vshrl.u32 %v1195, 7
        %v1197 = vsub.s32 1, %v1196
        %v1198 = vrot.slane %v1134, %v1197
        %v1199 = vlaneseq
        %v1200 = vshrl.u32 %v1199, 7
        %v1201 = vsub.s32 5, %v1200
        %v1202 = vrot.slane %v1134, %v1201
        %v1207 = vlaneseq
        %v1208 = vshrl.u32 %v1207, 7
        %v1209 = vsub.s32 1, %v1208
        %v1210 = vrot.slane %v1190, %v1209
        %v1211 = vlaneseq
        %v1212 = vshrl.u32 %v1211, 7
        %v1213 = vsub.s32 1, %v1212
        %v1214 = vrot.slane %v1194, %v1213
        %v1215 = vlaneseq
        %v1216 = vshrl.u32 %v1215, 7
        %v1217 = vsub.s32 1, %v1216
        %v1218 = vrot.slane %v1198, %v1217
        %v1219 = vlaneseq
        %v1220 = vshrl.u32 %v1219, 7
        %v1221 = vsub.s32 1, %v1220
        %v1222 = vrot.slane %v1202, %v1221
        %v1223 = vmul.f32 %v1185, %v1210
        %v1224 = vmul.f32 %v1185, %v1214
        %v1225 = vmul.f32 %v1185, %v1218
        %v1226 = vmul.f32 %v1185, %v1222
        %v1227 = vadd.f32 %v1179, %v1223
        %v1228 = vadd.f32 %v1180, %v1224
        %v1229 = vadd.f32 %v1181, %v1225
        %v1230 = vadd.f32 %v1182, %v1226
        %1231 = vset.pattern.permute.xlu0 2
        %1232 = vperm.xlu0 %1231, %v1135
        %v1233 = vpop.permute.xlu0 %1232
        %v1235 = vlaneseq
        %v1236 = vshrl.u32 %v1235, 7
        %v1237 = vsub.s32 2, %v1236
        %v1238 = vrot.slane %v1133, %v1237
        %v1239 = vlaneseq
        %v1240 = vshrl.u32 %v1239, 7
        %v1241 = vsub.s32 6, %v1240
        %v1242 = vrot.slane %v1133, %v1241
        %v1243 = vlaneseq
        %v1244 = vshrl.u32 %v1243, 7
        %v1245 = vsub.s32 2, %v1244
        %v1246 = vrot.slane %v1134, %v1245
        %v1247 = vlaneseq
        %v1248 = vshrl.u32 %v1247, 7
        %v1249 = vsub.s32 6, %v1248
        %v1250 = vrot.slane %v1134, %v1249
        %v1255 = vlaneseq
        %v1256 = vshrl.u32 %v1255, 7
        %v1257 = vsub.s32 2, %v1256
        %v1258 = vrot.slane %v1238, %v1257
        %v1259 = vlaneseq
        %v1260 = vshrl.u32 %v1259, 7
        %v1261 = vsub.s32 2, %v1260
        %v1262 = vrot.slane %v1242, %v1261
        %v1263 = vlaneseq
        %v1264 = vshrl.u32 %v1263, 7
        %v1265 = vsub.s32 2, %v1264
        %v1266 = vrot.slane %v1246, %v1265
        %v1267 = vlaneseq
        %v1268 = vshrl.u32 %v1267, 7
        %v1269 = vsub.s32 2, %v1268
        %v1270 = vrot.slane %v1250, %v1269
        %v1271 = vmul.f32 %v1233, %v1258
        %v1272 = vmul.f32 %v1233, %v1262
        %v1273 = vmul.f32 %v1233, %v1266
        %v1274 = vmul.f32 %v1233, %v1270
        %v1275 = vadd.f32 %v1227, %v1271
        %v1276 = vadd.f32 %v1228, %v1272
        %v1277 = vadd.f32 %v1229, %v1273
        %v1278 = vadd.f32 %v1230, %v1274
        %1279 = vset.pattern.permute.xlu0 3
        %1280 = vperm.xlu0 %1279, %v1135
        %v1281 = vpop.permute.xlu0 %1280
        %v1283 = vlaneseq
        %v1284 = vshrl.u32 %v1283, 7
        %v1285 = vsub.s32 3, %v1284
        %v1286 = vrot.slane %v1133, %v1285
        %v1287 = vlaneseq
        %v1288 = vshrl.u32 %v1287, 7
        %v1289 = vsub.s32 7, %v1288
        %v1290 = vrot.slane %v1133, %v1289
        %v1291 = vlaneseq
        %v1292 = vshrl.u32 %v1291, 7
        %v1293 = vsub.s32 3, %v1292
        %v1294 = vrot.slane %v1134, %v1293
        %v1295 = vlaneseq
        %v1296 = vshrl.u32 %v1295, 7
        %v1297 = vsub.s32 7, %v1296
        %v1298 = vrot.slane %v1134, %v1297
        %v1303 = vlaneseq
        %v1304 = vshrl.u32 %v1303, 7
        %v1305 = vsub.s32 3, %v1304
        %v1306 = vrot.slane %v1286, %v1305
        %v1307 = vlaneseq
        %v1308 = vshrl.u32 %v1307, 7
        %v1309 = vsub.s32 3, %v1308
        %v1310 = vrot.slane %v1290, %v1309
        %v1311 = vlaneseq
        %v1312 = vshrl.u32 %v1311, 7
        %v1313 = vsub.s32 3, %v1312
        %v1314 = vrot.slane %v1294, %v1313
        %v1315 = vlaneseq
        %v1316 = vshrl.u32 %v1315, 7
        %v1317 = vsub.s32 3, %v1316
        %v1318 = vrot.slane %v1298, %v1317
        %v1319 = vmul.f32 %v1281, %v1306
        %v1320 = vmul.f32 %v1281, %v1310
        %v1321 = vmul.f32 %v1281, %v1314
        %v1322 = vmul.f32 %v1281, %v1318
        %v1323 = vadd.f32 %v1275, %v1319
        %v1324 = vadd.f32 %v1276, %v1320
        %v1325 = vadd.f32 %v1277, %v1321
        %v1326 = vadd.f32 %v1278, %v1322
        %v1327 = vld [vmem:[%s4] sm:$0xff]
        %1329 = vset.pattern.permute.xlu0 0
        %1330 = vperm.xlu0 %1329, %v1327
        %v1331 = vpop.permute.xlu0 %1330
        %v1333 = vadd.f32 %v1323, %v1331
        %v1334 = vadd.f32 %v1324, %v1331
        %v1335 = vadd.f32 %v1325, %v1331
        %v1336 = vadd.f32 %v1326, %v1331
        %1337 = vst [vmem:[%s240] sm:$0xff] %v1333
        %1338 = vst [vmem:[%s240 + $0x8] sm:$0xff] %v1334
        %1339 = vst [vmem:[%s240 + $0x10] sm:$0xff] %v1335
        %1340 = vst [vmem:[%s240 + $0x18] sm:$0xff] %v1336
        %s1341 = sand.u32 %s140, 1
        %s1342 = scalar_lea.sflag [#allocation4], %s1341
        %s1343 = sand.u32 %s140, 1
        %s1344 = smul.addr %s1343, 32
        %s1345 = scalar_lea.vmem [#allocation5], %s1344
        // Predicated region
        $region45: #{tpu_custom_call.1} parent=39 // pred_check
          %p1346 = pneg %p150
        $region46: #{tpu_custom_call.1} parent=39 // pred_check_branch
          %1348 = sbr.rel (%p1346) target = $region48
        $region47: #{tpu_custom_call.1} parent=39 // pred_region
          %s1350 = ssub.s32 512, 512
          %1351 = vsyncadd %s1342, %s1350
          %s1352 = smul.addr %s22, 4
          %s1353 = smul.addr %s1352, 128
          %s1354 = scalar_lea.hbm %s5, %s1353
          %s1356 = sshll.u32 %s1345, 4
          %s1357 = int_to_ptr.vmem [resolvable:$true] %s1356
          %1359 = dma.vmem_to_hbm [thread:$0]  %s1357, 512, %s1354, %s1342
        $region48: #{tpu_custom_call.1} parent=39 // pred_fallthru
          _
      $region40: #{tpu_custom_call.1} parent=5 // pred_fallthru
        _
      %p1360 = scmp.le.s32.totalorder 2, %s17
      // Predicated region
      $region49: #{tpu_custom_call.1} parent=5 // pred_check
        %p1361 = pneg %p1360
      $region50: #{tpu_custom_call.1} parent=5 // pred_check_branch
        %1363 = sbr.rel (%p1361) target = $region52
      $region51: #{tpu_custom_call.1} parent=5 // pred_region
        %s1364 = ssub.s32 %s17, 2
        // Predicated region
        $region53: #{tpu_custom_call.1} parent=51 // pred_check
          %p1365 = pneg %p156
        $region54: #{tpu_custom_call.1} parent=51 // pred_check_branch
          %1367 = sbr.rel (%p1365) target = $region56
        $region55: #{tpu_custom_call.1} parent=51 // pred_region
          %s1368 = sand.u32 %s141, 1
          %s1369 = scalar_lea.sflag [#allocation4], %s1368
          %s1370 = sand.u32 %s141, 1
          %s1371 = smul.addr %s1370, 32
          %s1372 = scalar_lea.vmem [#allocation5], %s1371
          %1373 = dma.done %s1369, 512
        $region56: #{tpu_custom_call.1} parent=51 // pred_fallthru
          _
      $region52: #{tpu_custom_call.1} parent=5 // pred_fallthru
        _
    $region6: #{tpu_custom_call.1} parent=1 // loop_footer
      %s21 = sadd.s32 1, %s17
    $region7: #{tpu_custom_call.1} parent=1 // loop_footer_branch
      %16 = sbr.rel target = $region3
    $region8: #{tpu_custom_call.1} parent=1 // loop_exit
      _
    %1374 = vsyncpa [#allocation3], 1
    %s1375 = scalar_lea.sflag [#allocation3], 1
    %1376 = vsyncpa %s1375, 1
    %1377 = vsyncpa [#allocation4], 1
    %s1378 = scalar_lea.sflag [#allocation4], 1
    %1379 = vsyncpa %s1378, 1

</llo_original>
